<compile_context>
chip_gen: v7x
topology: tpu7x:2x2x1
jax: 0.10.0
libtpu: 0.0.40
codegen_flags: <defaults>
</compile_context>

<pallas_src>
import jax
import jax.numpy as jnp
from jax.experimental import pallas as pl
from jax.experimental.pallas import tpu as pltpu


def feature_head_kernel(v_ref, m_ref, wv_ref, wm_ref, b_ref, o_ref):
    # out = relu([v | m] @ [Wv ; Wm] + b); split matmul == concat + Linear.
    cdt = wv_ref.dtype
    # In-VMEM cast of streamed activations to the MXU dtype (free VPU filler
    # under MXU slack; avoids a separate HBM cast+copy pass in the wrapper).
    v = v_ref[...].astype(cdt)
    m = m_ref[...].astype(cdt)
    acc = jnp.dot(v, wv_ref[...], preferred_element_type=jnp.float32)
    acc = acc + jnp.dot(m, wm_ref[...], preferred_element_type=jnp.float32)
    acc = acc + b_ref[...]                    # (1, N) f32 bias broadcasts over rows
    o_ref[...] = jnp.maximum(acc, 0.0).astype(o_ref.dtype)


def _round_up(x, m):
    return ((x + m - 1) // m) * m


def _sublane(dtype):
    # Sublane alignment for block second-to-last dim: f32->8, bf16->16, int8->32.
    return 8 * max(1, 4 // jnp.dtype(dtype).itemsize)


def _vmem_budget_bytes():
    # Explicit VMEM budget: ~100 MiB on v5e/v6e (128 MiB physical),
    # ~54 MiB on v7x (64 MiB per TensorCore). Safe fallback for all chips.
    try:
        cap = int(pltpu.get_tpu_info().vmem_capacity_bytes)
    except Exception:
        cap = 64 * 1024 * 1024
    return min(100 * 1024 * 1024, int(cap * 0.85))


def _pick_tm(tm_max, M, Dv_p, Dm_p, N_p, in_isz, cw_isz, out_isz, budget, sub):
    # Cap TM so the grid has >= ~4 steps (shards across both v7x TensorCores,
    # keeps DMA/compute overlap), never below the sublane alignment.
    tm_cap = max(sub, _round_up(pl.cdiv(M, 4), sub))
    tm = max(sub, min(_round_up(tm_max, sub), tm_cap, _round_up(M, sub)))
    # Wv + Wm + bias are single-buffered residents.
    resident = (Dv_p + Dm_p) * N_p * cw_isz + N_p * 4
    while tm > sub:
        streamed = 2 * tm * (Dv_p * in_isz + Dm_p * in_isz + N_p * out_isz)
        scratch = tm * (Dv_p + Dm_p) * cw_isz + tm * N_p * 4   # in-kernel casts + f32 acc
        if resident + streamed + scratch <= int(budget * 0.8):
            break
        tm = max(sub, _round_up(tm // 2, sub))
    return tm


def base_feature_head(visual, motion, w, b, *, tm=512,
                      compute_dtype=None, out_dtype=None):
    """visual: [B, T, Dv], motion: [B, T, Dm], w: [Dv+Dm, d_model], b: [d_model].

    compute_dtype: dtype fed to the MXU. Defaults to bfloat16 for f32 inputs
                   (accumulation is always f32). out_dtype defaults to the
                   input dtype so module semantics are preserved.
    """
    B, T, Dv = visual.shape
    Dm = motion.shape[-1]
    d_model = w.shape[-1]
    if out_dtype is None:
        out_dtype = visual.dtype
    if compute_dtype is None:
        compute_dtype = jnp.bfloat16 if visual.dtype == jnp.float32 else visual.dtype

    M = B * T
    Dv_p = _round_up(Dv, 128)
    Dm_p = _round_up(Dm, 128)
    N_p = _round_up(d_model, 128)

    in_isz = jnp.dtype(visual.dtype).itemsize
    cw_isz = jnp.dtype(compute_dtype).itemsize
    out_isz = jnp.dtype(out_dtype).itemsize
    sub = max(_sublane(visual.dtype), _sublane(out_dtype))

    budget = _vmem_budget_bytes()
    TM = _pick_tm(tm, M, Dv_p, Dm_p, N_p, in_isz, cw_isz, out_isz, budget, sub)
    grid = (pl.cdiv(M, TM),)

    # Activations stay in their input dtype (cast happens in-kernel, in VMEM).
    # K padding only when feature dims are not 128-aligned (no-op for the real
    # 2048/1024 feature sizes); the M axis is never padded.
    v2 = visual.reshape(M, Dv)
    m2 = motion.reshape(M, Dm)
    if Dv_p != Dv:
        v2 = jnp.pad(v2, ((0, 0), (0, Dv_p - Dv)))
    if Dm_p != Dm:
        m2 = jnp.pad(m2, ((0, 0), (0, Dm_p - Dm)))
    # Weights/bias are small and VMEM-resident: cast + zero-pad in the wrapper.
    wv = jnp.pad(w[:Dv, :].astype(compute_dtype),
                 ((0, Dv_p - Dv), (0, N_p - d_model)))
    wm = jnp.pad(w[Dv:, :].astype(compute_dtype),
                 ((0, Dm_p - Dm), (0, N_p - d_model)))
    b2 = jnp.pad(b.astype(jnp.float32).reshape(1, d_model),
                 ((0, 0), (0, N_p - d_model)))

    cost = pl.CostEstimate(
        flops=2 * M * (Dv_p + Dm_p) * N_p,
        transcendentals=0,
        bytes_accessed=(v2.size * in_isz + m2.size * in_isz
                        + wv.size * cw_isz + wm.size * cw_isz + b2.size * 4
                        + M * N_p * out_isz))

    def build(single_buffer_resident):
        def resident_spec(shape):
            if single_buffer_resident:
                return pl.BlockSpec(shape, lambda i: (0, 0),
                                    pipeline_mode=pl.Buffered(1))
            return pl.BlockSpec(shape, lambda i: (0, 0))

        return pl.pallas_call(
            feature_head_kernel,
            out_shape=jax.ShapeDtypeStruct((M, N_p), out_dtype),
            grid_spec=pltpu.PrefetchScalarGridSpec(
                num_scalar_prefetch=0,
                grid=grid,
                in_specs=[
                    pl.BlockSpec((TM, Dv_p), lambda i: (i, 0)),   # visual rows (streamed)
                    pl.BlockSpec((TM, Dm_p), lambda i: (i, 0)),   # motion rows (streamed)
                    resident_spec((Dv_p, N_p)),                   # Wv (VMEM-resident)
                    resident_spec((Dm_p, N_p)),                   # Wm (VMEM-resident)
                    resident_spec((1, N_p)),                      # bias (VMEM-resident)
                ],
                out_specs=pl.BlockSpec((TM, N_p), lambda i: (i, 0)),
            ),
            compiler_params=pltpu.CompilerParams(
                dimension_semantics=("parallel",),
                vmem_limit_bytes=int(budget)),
            cost_estimate=cost,
        )

    try:
        out2 = build(True)(v2, m2, wv, wm, b2)
    except Exception:
        # Fallback for toolchains without BlockSpec(pipeline_mode=pl.Buffered(1)).
        out2 = build(False)(v2, m2, wv, wm, b2)

    return out2[:, :d_model].reshape(B, T, d_model)


def reference(visual, motion, w, b):
    fusion = jnp.concatenate([visual, motion], axis=-1)
    return jnp.maximum(fusion @ w + b, 0.0)


if __name__ == "__main__":
    key = jax.random.PRNGKey(0)

    # --- Test 1: tiny shapes, explicit f32 compute, tight tolerance ----------
    B, T = 2, 8
    Dv, Dm = 32, 32
    d_model = 32            # cfg.MODEL.FEATURE_HEAD.LINEAR_OUT_FEATURES
    fusion_size = Dv + Dm

    kv, km, kw, kb = jax.random.split(key, 4)
    visual = jax.random.normal(kv, (B, T, Dv), dtype=jnp.float32)
    motion = jax.random.normal(km, (B, T, Dm), dtype=jnp.float32)
    bound = 1.0 / (fusion_size ** 0.5)
    w = jax.random.uniform(kw, (fusion_size, d_model), jnp.float32,
                           minval=-bound, maxval=bound)
    b = jax.random.uniform(kb, (d_model,), jnp.float32,
                           minval=-bound, maxval=bound)

    out = base_feature_head(visual, motion, w, b, compute_dtype=jnp.float32)
    jax.block_until_ready(out)
    ref = reference(visual, motion, w, b)
    assert out.shape == (B, T, d_model)
    assert jnp.allclose(out, ref, atol=1e-5, rtol=1e-5)

    # --- Test 2: multi-tile grid + ragged dims (padding, masked tail block) --
    B2, T2 = 2, 200
    Dv2, Dm2, d2 = 160, 96, 100
    k1, k2, k3, k4 = jax.random.split(jax.random.PRNGKey(1), 4)
    visual2 = jax.random.normal(k1, (B2, T2, Dv2), dtype=jnp.float32)
    motion2 = jax.random.normal(k2, (B2, T2, Dm2), dtype=jnp.float32)
    bound2 = 1.0 / ((Dv2 + Dm2) ** 0.5)
    w2 = jax.random.uniform(k3, (Dv2 + Dm2, d2), jnp.float32,
                            minval=-bound2, maxval=bound2)
    b2 = jax.random.uniform(k4, (d2,), jnp.float32,
                            minval=-bound2, maxval=bound2)

    out2 = base_feature_head(visual2, motion2, w2, b2, tm=128,
                             compute_dtype=jnp.float32)
    jax.block_until_ready(out2)
    ref2 = reference(visual2, motion2, w2, b2)
    assert out2.shape == (B2, T2, d2)
    assert jnp.allclose(out2, ref2, atol=1e-4, rtol=1e-4)

    # --- Test 3: default path (bf16 MXU compute, f32 accumulation) -----------
    out_bf16 = base_feature_head(visual2, motion2, w2, b2, tm=128)
    jax.block_until_ready(out_bf16)
    ref_bf16 = reference(visual2.astype(jnp.bfloat16).astype(jnp.float32),
                         motion2.astype(jnp.bfloat16).astype(jnp.float32),
                         w2.astype(jnp.bfloat16).astype(jnp.float32), b2)
    assert jnp.allclose(out_bf16, ref_bf16, atol=2e-2, rtol=2e-2)

    print("KERNEL_OK")
</pallas_src>

<mosaic_0001>
module attributes {stable_mosaic.version = 11 : i64} {
  func.func @feature_head_kernel(%arg0: i32, %arg1: memref<8x128xf32, #tpu.memory_space<vmem>>, %arg2: memref<8x128xf32, #tpu.memory_space<vmem>>, %arg3: memref<128x128xf32, #tpu.memory_space<vmem>>, %arg4: memref<128x128xf32, #tpu.memory_space<vmem>>, %arg5: memref<1x128xf32, #tpu.memory_space<vmem>>, %arg6: memref<8x128xf32, #tpu.memory_space<vmem>>) attributes {dimension_semantics = [#tpu.dimension_semantics<parallel>], iteration_bounds = array<i64: 2>, scalar_prefetch = 0 : i64, scratch_operands = 0 : i64, tpu.core_type = #tpu.core_type<tc>, window_params = [{transform_indices = @transform_0, window_bounds = array<i64: 8, 128>}, {transform_indices = @transform_1, window_bounds = array<i64: 8, 128>}, {pipeline_mode = #tpu.pipeline_mode<synchronous>, transform_indices = @transform_2, window_bounds = array<i64: 128, 128>}, {pipeline_mode = #tpu.pipeline_mode<synchronous>, transform_indices = @transform_3, window_bounds = array<i64: 128, 128>}, {pipeline_mode = #tpu.pipeline_mode<synchronous>, transform_indices = @transform_4, window_bounds = array<i64: 1, 128>}, {transform_indices = @transform_5, window_bounds = array<i64: 8, 128>}]} {
    %c0 = arith.constant 0 : index
    %c0_0 = arith.constant 0 : index
    %0 = vector.load %arg1[%c0, %c0_0] : memref<8x128xf32, #tpu.memory_space<vmem>>, vector<8x128xf32>
    %c0_1 = arith.constant 0 : index
    %c0_2 = arith.constant 0 : index
    %1 = vector.load %arg2[%c0_1, %c0_2] : memref<8x128xf32, #tpu.memory_space<vmem>>, vector<8x128xf32>
    %c0_3 = arith.constant 0 : index
    %c0_4 = arith.constant 0 : index
    %2 = vector.load %arg3[%c0_3, %c0_4] : memref<128x128xf32, #tpu.memory_space<vmem>>, vector<128x128xf32>
    %cst = arith.constant dense<0.000000e+00> : vector<8x128xf32>
    %3 = tpu.matmul %0, %2, %cst {dimension_numbers = #tpu.dot_dimension_numbers<[1], [0], [0], [1], [0, 0, 1, 1], [], []>} : vector<8x128xf32>, vector<128x128xf32>, vector<8x128xf32> -> vector<8x128xf32>
    %c0_5 = arith.constant 0 : index
    %c0_6 = arith.constant 0 : index
    %4 = vector.load %arg4[%c0_5, %c0_6] : memref<128x128xf32, #tpu.memory_space<vmem>>, vector<128x128xf32>
    %cst_7 = arith.constant dense<0.000000e+00> : vector<8x128xf32>
    %5 = tpu.matmul %1, %4, %cst_7 {dimension_numbers = #tpu.dot_dimension_numbers<[1], [0], [0], [1], [0, 0, 1, 1], [], []>} : vector<8x128xf32>, vector<128x128xf32>, vector<8x128xf32> -> vector<8x128xf32>
    %6 = arith.addf %3, %5 : vector<8x128xf32>
    %c0_8 = arith.constant 0 : index
    %c0_9 = arith.constant 0 : index
    %7 = vector.load %arg5[%c0_8, %c0_9] : memref<1x128xf32, #tpu.memory_space<vmem>>, vector<1x128xf32>
    %8 = vector.broadcast %7 : vector<1x128xf32> to vector<8x128xf32>
    %9 = arith.addf %6, %8 : vector<8x128xf32>
    %cst_10 = arith.constant 0.000000e+00 : f32
    %10 = vector.broadcast %cst_10 : f32 to vector<8x128xf32>
    %11 = arith.maximumf %9, %10 : vector<8x128xf32>
    %c0_11 = arith.constant 0 : index
    %c0_12 = arith.constant 0 : index
    %12 = vector.load %arg6[%c0_11, %c0_12] : memref<8x128xf32, #tpu.memory_space<vmem>>, vector<8x128xf32>
    tpu.vector_store %arg6[%c0_11, %c0_12], %11 {strides = array<i32>} : memref<8x128xf32, #tpu.memory_space<vmem>>, vector<8x128xf32>,
    return
  }
  func.func @transform_0(%arg0: i32) -> (i32, i32) {
    %c0_i32 = arith.constant 0 : i32
    %c0_i32_0 = arith.constant 0 : i32
    return %arg0, %c0_i32 : i32, i32
  }
  func.func @transform_1(%arg0: i32) -> (i32, i32) {
    %c0_i32 = arith.constant 0 : i32
    %c0_i32_0 = arith.constant 0 : i32
    return %arg0, %c0_i32 : i32, i32
  }
  func.func @transform_2(%arg0: i32) -> (i32, i32) {
    %c0_i32 = arith.constant 0 : i32
    %c0_i32_0 = arith.constant 0 : i32
    %c0_i32_1 = arith.constant 0 : i32
    return %c0_i32, %c0_i32_0 : i32, i32
  }
  func.func @transform_3(%arg0: i32) -> (i32, i32) {
    %c0_i32 = arith.constant 0 : i32
    %c0_i32_0 = arith.constant 0 : i32
    %c0_i32_1 = arith.constant 0 : i32
    return %c0_i32, %c0_i32_0 : i32, i32
  }
  func.func @transform_4(%arg0: i32) -> (i32, i32) {
    %c0_i32 = arith.constant 0 : i32
    %c0_i32_0 = arith.constant 0 : i32
    %c0_i32_1 = arith.constant 0 : i32
    return %c0_i32, %c0_i32_0 : i32, i32
  }
  func.func @transform_5(%arg0: i32) -> (i32, i32) {
    %c0_i32 = arith.constant 0 : i32
    %c0_i32_0 = arith.constant 0 : i32
    return %arg0, %c0_i32 : i32, i32
  }
}

module attributes {stable_mosaic.version = 11 : i64} {
  func.func @feature_head_kernel(%arg0: i32, %arg1: memref<8x128xf32, #tpu.memory_space<vmem>>, %arg2: memref<8x128xf32, #tpu.memory_space<vmem>>, %arg3: memref<128x128xf32, #tpu.memory_space<vmem>>, %arg4: memref<128x128xf32, #tpu.memory_space<vmem>>, %arg5: memref<1x128xf32, #tpu.memory_space<vmem>>, %arg6: memref<8x128xf32, #tpu.memory_space<vmem>>) attributes {dimension_semantics = [#tpu.dimension_semantics<parallel>], iteration_bounds = array<i64: 2>, scalar_prefetch = 0 : i64, scratch_operands = 0 : i64, tpu.core_type = #tpu.core_type<tc>, window_params = [{transform_indices = @transform_0, window_bounds = array<i64: 8, 128>}, {transform_indices = @transform_1, window_bounds = array<i64: 8, 128>}, {pipeline_mode = #tpu.pipeline_mode<synchronous>, transform_indices = @transform_2, window_bounds = array<i64: 128, 128>}, {pipeline_mode = #tpu.pipeline_mode<synchronous>, transform_indices = @transform_3, window_bounds = array<i64: 128, 128>}, {pipeline_mode = #tpu.pipeline_mode<synchronous>, transform_indices = @transform_4, window_bounds = array<i64: 1, 128>}, {transform_indices = @transform_5, window_bounds = array<i64: 8, 128>}]} {
    %c0 = arith.constant 0 : index
    %c0_0 = arith.constant 0 : index
    %0 = vector.load %arg1[%c0, %c0_0] : memref<8x128xf32, #tpu.memory_space<vmem>>, vector<8x128xf32>
    %c0_1 = arith.constant 0 : index
    %c0_2 = arith.constant 0 : index
    %1 = vector.load %arg2[%c0_1, %c0_2] : memref<8x128xf32, #tpu.memory_space<vmem>>, vector<8x128xf32>
    %c0_3 = arith.constant 0 : index
    %c0_4 = arith.constant 0 : index
    %2 = vector.load %arg3[%c0_3, %c0_4] : memref<128x128xf32, #tpu.memory_space<vmem>>, vector<128x128xf32>
    %cst = arith.constant dense<0.000000e+00> : vector<8x128xf32>
    %3 = tpu.matmul %0, %2, %cst {dimension_numbers = #tpu.dot_dimension_numbers<[1], [0], [0], [1], [0, 0, 1, 1], [], []>} : vector<8x128xf32>, vector<128x128xf32>, vector<8x128xf32> -> vector<8x128xf32>
    %c0_5 = arith.constant 0 : index
    %c0_6 = arith.constant 0 : index
    %4 = vector.load %arg4[%c0_5, %c0_6] : memref<128x128xf32, #tpu.memory_space<vmem>>, vector<128x128xf32>
    %cst_7 = arith.constant dense<0.000000e+00> : vector<8x128xf32>
    %5 = tpu.matmul %1, %4, %cst_7 {dimension_numbers = #tpu.dot_dimension_numbers<[1], [0], [0], [1], [0, 0, 1, 1], [], []>} : vector<8x128xf32>, vector<128x128xf32>, vector<8x128xf32> -> vector<8x128xf32>
    %6 = arith.addf %3, %5 : vector<8x128xf32>
    %c0_8 = arith.constant 0 : index
    %c0_9 = arith.constant 0 : index
    %7 = vector.load %arg5[%c0_8, %c0_9] : memref<1x128xf32, #tpu.memory_space<vmem>>, vector<1x128xf32>
    %8 = vector.broadcast %7 : vector<1x128xf32> to vector<8x128xf32>
    %9 = arith.addf %6, %8 : vector<8x128xf32>
    %cst_10 = arith.constant 0.000000e+00 : f32
    %10 = vector.broadcast %cst_10 : f32 to vector<8x128xf32>
    %11 = arith.maximumf %9, %10 : vector<8x128xf32>
    %c0_11 = arith.constant 0 : index
    %c0_12 = arith.constant 0 : index
    %12 = vector.load %arg6[%c0_11, %c0_12] : memref<8x128xf32, #tpu.memory_space<vmem>>, vector<8x128xf32>
    tpu.vector_store %arg6[%c0_11, %c0_12], %11 {strides = array<i32>} : memref<8x128xf32, #tpu.memory_space<vmem>>, vector<8x128xf32>,
    return
  }
  func.func @transform_0(%arg0: i32) -> (i32, i32) {
    %c0_i32 = arith.constant 0 : i32
    %c0_i32_0 = arith.constant 0 : i32
    return %arg0, %c0_i32 : i32, i32
  }
  func.func @transform_1(%arg0: i32) -> (i32, i32) {
    %c0_i32 = arith.constant 0 : i32
    %c0_i32_0 = arith.constant 0 : i32
    return %arg0, %c0_i32 : i32, i32
  }
  func.func @transform_2(%arg0: i32) -> (i32, i32) {
    %c0_i32 = arith.constant 0 : i32
    %c0_i32_0 = arith.constant 0 : i32
    %c0_i32_1 = arith.constant 0 : i32
    return %c0_i32, %c0_i32_0 : i32, i32
  }
  func.func @transform_3(%arg0: i32) -> (i32, i32) {
    %c0_i32 = arith.constant 0 : i32
    %c0_i32_0 = arith.constant 0 : i32
    %c0_i32_1 = arith.constant 0 : i32
    return %c0_i32, %c0_i32_0 : i32, i32
  }
  func.func @transform_4(%arg0: i32) -> (i32, i32) {
    %c0_i32 = arith.constant 0 : i32
    %c0_i32_0 = arith.constant 0 : i32
    %c0_i32_1 = arith.constant 0 : i32
    return %c0_i32, %c0_i32_0 : i32, i32
  }
  func.func @transform_5(%arg0: i32) -> (i32, i32) {
    %c0_i32 = arith.constant 0 : i32
    %c0_i32_0 = arith.constant 0 : i32
    return %arg0, %c0_i32 : i32, i32
  }
}

</mosaic_0001>

<llo_original>
// kernel: tpu_custom_call.1
$region0: #{tpu_custom_call.1}
  #allocation0 [shape = 'u32[]', space=smem, size = 0x4, offset = 0x4, fixed_abs, tag = 'smem constant byte address 0x4 - core index']
  #allocation1 [shape = 'u32[144,128]{1,0:T(1,128)}', space=vmem, size = 0x12000, scoped, tag = 'internal scratch']
  %s0 = inlined_call_operand.hbm [shape: f32[16,128], index: 0, kind: input, shape index: {}]
  %s1 = inlined_call_operand.hbm [shape: f32[16,128], index: 1, kind: input, shape index: {}]
  %s2 = inlined_call_operand.hbm [shape: f32[128,128], index: 2, kind: input, shape index: {}]
  %s3 = inlined_call_operand.hbm [shape: f32[128,128], index: 3, kind: input, shape index: {}]
  %s4 = inlined_call_operand.vmem [shape: f32[1,128], index: 4, kind: input, shape index: {}]
  %s5 = inlined_call_operand.hbm [shape: f32[16,128], index: 5, kind: output, shape index: {}]
  %s6 = sld [smem:[#allocation0]]
  $region69: #{tpu_custom_call.1} parent=0
    _
  %s8 = ssub.s32 1, %s6
  %s9 = scalar_select 0, %s8, %s6
  $region1: #{tpu_custom_call.1} parent=0
    #allocation2 [shape = 'u8[8192]{0}', space=vmem, size = 0x2000, scoped, tag = 'input window, operand 0']
    #allocation3 [shape = 's32[2]{0}', space=sflag, size = 0x8, scoped, tag = 'scoped memory for tpu_custom_call.1']
    #allocation4 [shape = 's32[2]{0}', space=sflag, size = 0x8, scoped, tag = 'scoped memory for tpu_custom_call.1']
    #allocation5 [shape = 'u8[8192]{0}', space=vmem, size = 0x2000, scoped, tag = 'input window, operand 1']
    #allocation6 [shape = 's32[2]{0}', space=sflag, size = 0x8, scoped, tag = 'scoped memory for tpu_custom_call.1']
    #allocation7 [shape = 'u8[65536]{0}', space=vmem, size = 0x10000, scoped, tag = 'input window, operand 2, single buffered']
    #allocation8 [shape = 'u8[65536]{0}', space=vmem, size = 0x10000, scoped, tag = 'input window, operand 3, single buffered']
    #allocation9 [shape = 's32[1]{0}', space=sflag, size = 0x4, scoped, tag = 'scoped memory for tpu_custom_call.1']
    #allocation10 [shape = 'u8[8192]{0}', space=vmem, size = 0x2000, scoped, tag = 'output window, operand 0']
    %10 = vsyncpa [#allocation3], 0
    %s11 = scalar_lea.sflag [#allocation3], 1
    %12 = vsyncpa %s11, 0
    %13 = vsyncpa [#allocation6], 0
    %s14 = scalar_lea.sflag [#allocation6], 1
    %15 = vsyncpa %s14, 0
    %16 = vsyncpa [#allocation9], 0
    %17 = vsyncpa [#allocation4], 0
    %s18 = scalar_lea.sflag [#allocation4], 1
    %19 = vsyncpa %s18, 0
    loop: start=0, step=1, limit=4
    $region2: #{tpu_custom_call.1} parent=1 // loop_pre_header
      _
    $region3: #{tpu_custom_call.1} parent=1 // loop_header
      %s21 = sphi 0, %s25
      %p22 = scmp.ge.s32.totalorder %s21, 4
      %s31 = sphi 0, %s33
      %s34 = sphi 0, %s31
      %s35 = sphi 0, %s34
      %s51 = sphi 0, %s35
      %s57 = sphi 0, %s59
      %s60 = sphi 0, %s57
      %s61 = sphi 0, %s60
      %s77 = sphi 0, %s61
      %s81 = sphi 0, %s81
      %s83 = sphi 0, %s81
      %s84 = sphi 0, %s83
      %s98 = sphi 0, %s84
      %s102 = sphi 0, %s102
      %s104 = sphi 0, %s102
      %s105 = sphi 0, %s104
      %s119 = sphi 0, %s105
      %s123 = sphi 0, %s123
      %s125 = sphi 0, %s123
      %s126 = sphi 0, %s125
      %s140 = sphi 0, %s126
      %s146 = sphi 0, %s148
      %s149 = sphi 0, %s146
      %s150 = sphi 0, %s149
      %s166 = sphi 0, %s150
    $region4: #{tpu_custom_call.1} parent=1 // loop_header_branch
      %24 = sbr.rel (%p22) target = $region8
    $region5: #{tpu_custom_call.1} parent=1 // loop_body
      %s26 = ssub.s32 %s21, 1
      %s27 = ssub.s32 %s21, 2
      %s28 = sadd.s32 %s21, 1
      %s29 = ssub.s32 %s21, %s28
      %p30 = scmp.eq.s32.totalorder %s29, 0
      %s32 = sadd.s32 %s31, 1
      %s33 = scalar_select %p30, %s31, %s32
      %p36 = pneg %p30
      %p37 = scmp.eq.s32.totalorder %s21, 1
      %p38 = por %p36, %p37
      %p39 = scmp.ne.s32.totalorder %s31, %s34
      %p40 = scmp.eq.s32.totalorder %s21, 0
      %p41 = por %p39, %p40
      %p42 = scmp.ne.s32.totalorder %s31, %s34
      %p43 = scmp.eq.s32.totalorder %s26, 1
      %p44 = por %p42, %p43
      %p45 = scmp.ne.s32.totalorder %s34, %s35
      %p46 = scmp.eq.s32.totalorder %s26, 0
      %p47 = por %p45, %p46
      %p48 = scmp.ne.s32.totalorder %s34, %s35
      %p49 = scmp.eq.s32.totalorder %s27, 1
      %p50 = por %p48, %p49
      %p52 = scmp.ne.s32.totalorder %s35, %s51
      %p53 = scmp.eq.s32.totalorder %s27, 0
      %p54 = por %p52, %p53
      %s55 = ssub.s32 %s21, %s28
      %p56 = scmp.eq.s32.totalorder %s55, 0
      %s58 = sadd.s32 %s57, 1
      %s59 = scalar_select %p56, %s57, %s58
      %p62 = pneg %p56
      %p63 = scmp.eq.s32.totalorder %s21, 1
      %p64 = por %p62, %p63
      %p65 = scmp.ne.s32.totalorder %s57, %s60
      %p66 = scmp.eq.s32.totalorder %s21, 0
      %p67 = por %p65, %p66
      %p68 = scmp.ne.s32.totalorder %s57, %s60
      %p69 = scmp.eq.s32.totalorder %s26, 1
      %p70 = por %p68, %p69
      %p71 = scmp.ne.s32.totalorder %s60, %s61
      %p72 = scmp.eq.s32.totalorder %s26, 0
      %p73 = por %p71, %p72
      %p74 = scmp.ne.s32.totalorder %s60, %s61
      %p75 = scmp.eq.s32.totalorder %s27, 1
      %p76 = por %p74, %p75
      %p78 = scmp.ne.s32.totalorder %s61, %s77
      %p79 = scmp.eq.s32.totalorder %s27, 0
      %p80 = por %p78, %p79
      %s82 = sadd.s32 %s81, 1
      %p85 = scmp.eq.s32.totalorder %s21, 1
      %p86 = scmp.ne.s32.totalorder %s81, %s83
      %p87 = scmp.eq.s32.totalorder %s21, 0
      %p88 = por %p86, %p87
      %p89 = scmp.ne.s32.totalorder %s81, %s83
      %p90 = scmp.eq.s32.totalorder %s26, 1
      %p91 = por %p89, %p90
      %p92 = scmp.ne.s32.totalorder %s83, %s84
      %p93 = scmp.eq.s32.totalorder %s26, 0
      %p94 = por %p92, %p93
      %p95 = scmp.ne.s32.totalorder %s83, %s84
      %p96 = scmp.eq.s32.totalorder %s27, 1
      %p97 = por %p95, %p96
      %p99 = scmp.ne.s32.totalorder %s84, %s98
      %p100 = scmp.eq.s32.totalorder %s27, 0
      %p101 = por %p99, %p100
      %s103 = sadd.s32 %s102, 1
      %p106 = scmp.eq.s32.totalorder %s21, 1
      %p107 = scmp.ne.s32.totalorder %s102, %s104
      %p108 = scmp.eq.s32.totalorder %s21, 0
      %p109 = por %p107, %p108
      %p110 = scmp.ne.s32.totalorder %s102, %s104
      %p111 = scmp.eq.s32.totalorder %s26, 1
      %p112 = por %p110, %p111
      %p113 = scmp.ne.s32.totalorder %s104, %s105
      %p114 = scmp.eq.s32.totalorder %s26, 0
      %p115 = por %p113, %p114
      %p116 = scmp.ne.s32.totalorder %s104, %s105
      %p117 = scmp.eq.s32.totalorder %s27, 1
      %p118 = por %p116, %p117
      %p120 = scmp.ne.s32.totalorder %s105, %s119
      %p121 = scmp.eq.s32.totalorder %s27, 0
      %p122 = por %p120, %p121
      %s124 = sadd.s32 %s123, 1
      %p127 = scmp.eq.s32.totalorder %s21, 1
      %p128 = scmp.ne.s32.totalorder %s123, %s125
      %p129 = scmp.eq.s32.totalorder %s21, 0
      %p130 = por %p128, %p129
      %p131 = scmp.ne.s32.totalorder %s123, %s125
      %p132 = scmp.eq.s32.totalorder %s26, 1
      %p133 = por %p131, %p132
      %p134 = scmp.ne.s32.totalorder %s125, %s126
      %p135 = scmp.eq.s32.totalorder %s26, 0
      %p136 = por %p134, %p135
      %p137 = scmp.ne.s32.totalorder %s125, %s126
      %p138 = scmp.eq.s32.totalorder %s27, 1
      %p139 = por %p137, %p138
      %p141 = scmp.ne.s32.totalorder %s126, %s140
      %p142 = scmp.eq.s32.totalorder %s27, 0
      %p143 = por %p141, %p142
      %s144 = ssub.s32 %s21, %s28
      %p145 = scmp.eq.s32.totalorder %s144, 0
      %s147 = sadd.s32 %s146, 1
      %s148 = scalar_select %p145, %s146, %s147
      %p151 = pneg %p145
      %p152 = scmp.eq.s32.totalorder %s21, 1
      %p153 = por %p151, %p152
      %p154 = scmp.ne.s32.totalorder %s146, %s149
      %p155 = scmp.eq.s32.totalorder %s21, 0
      %p156 = por %p154, %p155
      %p157 = scmp.ne.s32.totalorder %s146, %s149
      %p158 = scmp.eq.s32.totalorder %s26, 1
      %p159 = por %p157, %p158
      %p160 = scmp.ne.s32.totalorder %s149, %s150
      %p161 = scmp.eq.s32.totalorder %s26, 0
      %p162 = por %p160, %p161
      %p163 = scmp.ne.s32.totalorder %s149, %s150
      %p164 = scmp.eq.s32.totalorder %s27, 1
      %p165 = por %p163, %p164
      %p167 = scmp.ne.s32.totalorder %s150, %s166
      %p168 = scmp.eq.s32.totalorder %s27, 0
      %p169 = por %p167, %p168
      %p170 = scmp.le.s32.totalorder 1, %s21
      %p171 = scmp.lt.s32.totalorder %s21, 3
      %p172 = pnand %p170, %p171
      %p173 = pneg %p172
      // Predicated region
      $region9: #{tpu_custom_call.1} parent=5 // pred_check
        _
      $region10: #{tpu_custom_call.1} parent=5 // pred_check_branch
        %175 = sbr.rel (%p172) target = $region12
      $region11: #{tpu_custom_call.1} parent=5 // pred_region
        %s176 = ssub.s32 %s21, 1
        // Predicated region
        $region13: #{tpu_custom_call.1} parent=11 // pred_check
          %p177 = pneg %p94
        $region14: #{tpu_custom_call.1} parent=11 // pred_check_branch
          %179 = sbr.rel (%p177) target = $region16
        $region15: #{tpu_custom_call.1} parent=11 // pred_region
          %s181 = ssub.s32 2048, 2048
          %182 = vsyncadd [#allocation6], %s181
          %s183 = sshll.u32 [#allocation7], 4
          %s184 = int_to_ptr.vmem [resolvable:$true] %s183
          %189 = dma.hbm_to_vmem [thread:$0]  %s2, 2048, %s184, [#allocation6], 128, 128, 8
        $region16: #{tpu_custom_call.1} parent=11 // pred_fallthru
          _
        // Predicated region
        $region17: #{tpu_custom_call.1} parent=11 // pred_check
          %p190 = pneg %p115
        $region18: #{tpu_custom_call.1} parent=11 // pred_check_branch
          %192 = sbr.rel (%p190) target = $region20
        $region19: #{tpu_custom_call.1} parent=11 // pred_region
          %s194 = ssub.s32 2048, 2048
          %195 = vsyncadd [#allocation9], %s194
          %s196 = sshll.u32 [#allocation8], 4
          %s197 = int_to_ptr.vmem [resolvable:$true] %s196
          %202 = dma.hbm_to_vmem [thread:$0]  %s3, 2048, %s197, [#allocation9], 128, 128, 8
        $region20: #{tpu_custom_call.1} parent=11 // pred_fallthru
          _
        // Predicated region
        $region21: #{tpu_custom_call.1} parent=11 // pred_check
          %p203 = pneg %p136
        $region22: #{tpu_custom_call.1} parent=11 // pred_check_branch
          %205 = sbr.rel (%p203) target = $region24
        $region23: #{tpu_custom_call.1} parent=11 // pred_region
          _
        $region24: #{tpu_custom_call.1} parent=11 // pred_fallthru
          _
      $region12: #{tpu_custom_call.1} parent=5 // pred_fallthru
        _
      %p206 = scmp.lt.s32.totalorder %s21, 2
      // Predicated region
      $region25: #{tpu_custom_call.1} parent=5 // pred_check
        %p207 = pneg %p206
      $region26: #{tpu_custom_call.1} parent=5 // pred_check_branch
        %209 = sbr.rel (%p207) target = $region28
      $region27: #{tpu_custom_call.1} parent=5 // pred_region
        // Predicated region
        $region29: #{tpu_custom_call.1} parent=27 // pred_check
          %p210 = pneg %p41
        $region30: #{tpu_custom_call.1} parent=27 // pred_check_branch
          %212 = sbr.rel (%p210) target = $region32
        $region31: #{tpu_custom_call.1} parent=27 // pred_region
          %s213 = sand.u32 %s31, 1
          %s214 = scalar_lea.sflag [#allocation3], %s213
          %s215 = sand.u32 %s31, 1
          %s216 = smul.addr %s215, 8
          %s217 = scalar_lea.vmem [#allocation2], %s216
          %s219 = ssub.s32 128, 128
          %220 = vsyncadd %s214, %s219
          %s221 = smul.addr %s21, 128
          %s222 = scalar_lea.hbm %s0, %s221
          %s224 = sshll.u32 %s217, 4
          %s225 = int_to_ptr.vmem [resolvable:$true] %s224
          %227 = dma.hbm_to_vmem [thread:$0]  %s222, 128, %s225, %s214
        $region32: #{tpu_custom_call.1} parent=27 // pred_fallthru
          _
        // Predicated region
        $region33: #{tpu_custom_call.1} parent=27 // pred_check
          %p228 = pneg %p67
        $region34: #{tpu_custom_call.1} parent=27 // pred_check_branch
          %230 = sbr.rel (%p228) target = $region36
        $region35: #{tpu_custom_call.1} parent=27 // pred_region
          %s231 = sand.u32 %s21, 1
          %s232 = scalar_lea.sflag [#allocation6], %s231
          %s233 = sand.u32 %s57, 1
          %s234 = smul.addr %s233, 8
          %s235 = scalar_lea.vmem [#allocation5], %s234
          %s237 = ssub.s32 128, 128
          %238 = vsyncadd %s232, %s237
          %s239 = smul.addr %s21, 128
          %s240 = scalar_lea.hbm %s1, %s239
          %s242 = sshll.u32 %s235, 4
          %s243 = int_to_ptr.vmem [resolvable:$true] %s242
          %245 = dma.hbm_to_vmem [thread:$0]  %s240, 128, %s243, %s232
        $region36: #{tpu_custom_call.1} parent=27 // pred_fallthru
          _
      $region28: #{tpu_custom_call.1} parent=5 // pred_fallthru
        _
      %p246 = scmp.le.s32.totalorder 1, %s21
      %p247 = scmp.lt.s32.totalorder %s21, 3
      %p248 = pnand %p246, %p247
      %p249 = pneg %p248
      // Predicated region
      $region37: #{tpu_custom_call.1} parent=5 // pred_check
        _
      $region38: #{tpu_custom_call.1} parent=5 // pred_check_branch
        %251 = sbr.rel (%p248) target = $region40
      $region39: #{tpu_custom_call.1} parent=5 // pred_region
        %s252 = ssub.s32 %s21, 1
        %s253 = sand.u32 %s34, 1
        %s254 = scalar_lea.sflag [#allocation3], %s253
        %s255 = sand.u32 %s34, 1
        %s256 = smul.addr %s255, 8
        %s257 = scalar_lea.vmem [#allocation2], %s256
        // Predicated region
        $region41: #{tpu_custom_call.1} parent=39 // pred_check
          %p258 = pneg %p47
        $region42: #{tpu_custom_call.1} parent=39 // pred_check_branch
          %260 = sbr.rel (%p258) target = $region44
        $region43: #{tpu_custom_call.1} parent=39 // pred_region
          %261 = dma.done %s254, 128
        $region44: #{tpu_custom_call.1} parent=39 // pred_fallthru
          _
        %s262 = sand.u32 %s26, 1
        %s263 = scalar_lea.sflag [#allocation6], %s262
        %s264 = sand.u32 %s60, 1
        %s265 = smul.addr %s264, 8
        %s266 = scalar_lea.vmem [#allocation5], %s265
        // Predicated region
        $region45: #{tpu_custom_call.1} parent=39 // pred_check
          %p267 = pneg %p73
        $region46: #{tpu_custom_call.1} parent=39 // pred_check_branch
          %269 = sbr.rel (%p267) target = $region48
        $region47: #{tpu_custom_call.1} parent=39 // pred_region
          %270 = dma.done %s263, 128
        $region48: #{tpu_custom_call.1} parent=39 // pred_fallthru
          _
        // Predicated region
        $region49: #{tpu_custom_call.1} parent=39 // pred_check
          %p271 = pneg %p94
        $region50: #{tpu_custom_call.1} parent=39 // pred_check_branch
          %273 = sbr.rel (%p271) target = $region52
        $region51: #{tpu_custom_call.1} parent=39 // pred_region
          %274 = dma.done [#allocation6], 2048
        $region52: #{tpu_custom_call.1} parent=39 // pred_fallthru
          _
        // Predicated region
        $region53: #{tpu_custom_call.1} parent=39 // pred_check
          %p275 = pneg %p115
        $region54: #{tpu_custom_call.1} parent=39 // pred_check_branch
          %277 = sbr.rel (%p275) target = $region56
        $region55: #{tpu_custom_call.1} parent=39 // pred_region
          %278 = dma.done [#allocation9], 2048
        $region56: #{tpu_custom_call.1} parent=39 // pred_fallthru
          _
        %s279 = sand.u32 %s34, 1
        %s280 = scalar_lea.sflag [#allocation3], %s279
        %s281 = sand.u32 %s34, 1
        %s282 = smul.addr %s281, 8
        %s283 = scalar_lea.vmem [#allocation2], %s282
        %p284 = pneg %p47
        %p285 = pneg %p44
        %s286 = sand.u32 %s26, 1
        %s287 = scalar_lea.sflag [#allocation6], %s286
        %s288 = sand.u32 %s60, 1
        %s289 = smul.addr %s288, 8
        %s290 = scalar_lea.vmem [#allocation5], %s289
        %p291 = pneg %p73
        %p292 = pneg %p70
        %p293 = pneg %p94
        %p294 = pneg %p91
        %p295 = pneg %p115
        %p296 = pneg %p112
        %p297 = pneg %p136
        %p298 = pneg %p133
        %p299 = pneg %p162
        %p300 = pneg %p159
        %s301 = sand.u32 %s149, 1
        %s302 = scalar_lea.sflag [#allocation4], %s301
        %s303 = sand.u32 %s149, 1
        %s304 = smul.addr %s303, 8
        %s305 = scalar_lea.vmem [#allocation10], %s304
        %v306 = vld [vmem:[%s257] sm:$0xff]
        %v307 = vld [vmem:[%s266] sm:$0xff]
        %v308 = vld [vmem:[#allocation7] sm:$0xff]
        %v309 = vld [vmem:[#allocation7 + $0x8] sm:$0xff]
        %v310 = vld [vmem:[#allocation7 + $0x10] sm:$0xff]
        %v311 = vld [vmem:[#allocation7 + $0x18] sm:$0xff]
        %v312 = vld [vmem:[#allocation7 + $0x20] sm:$0xff]
        %v313 = vld [vmem:[#allocation7 + $0x28] sm:$0xff]
        %v314 = vld [vmem:[#allocation7 + $0x30] sm:$0xff]
        %v315 = vld [vmem:[#allocation7 + $0x38] sm:$0xff]
        %v316 = vld [vmem:[#allocation7 + $0x40] sm:$0xff]
        %v317 = vld [vmem:[#allocation7 + $0x48] sm:$0xff]
        %v318 = vld [vmem:[#allocation7 + $0x50] sm:$0xff]
        %v319 = vld [vmem:[#allocation7 + $0x58] sm:$0xff]
        %v320 = vld [vmem:[#allocation7 + $0x60] sm:$0xff]
        %v321 = vld [vmem:[#allocation7 + $0x68] sm:$0xff]
        %v322 = vld [vmem:[#allocation7 + $0x70] sm:$0xff]
        %v323 = vld [vmem:[#allocation7 + $0x78] sm:$0xff]
        %v324 = vld [vmem:[#allocation8] sm:$0xff]
        %v325 = vld [vmem:[#allocation8 + $0x8] sm:$0xff]
        %v326 = vld [vmem:[#allocation8 + $0x10] sm:$0xff]
        %v327 = vld [vmem:[#allocation8 + $0x18] sm:$0xff]
        %v328 = vld [vmem:[#allocation8 + $0x20] sm:$0xff]
        %v329 = vld [vmem:[#allocation8 + $0x28] sm:$0xff]
        %v330 = vld [vmem:[#allocation8 + $0x30] sm:$0xff]
        %v331 = vld [vmem:[#allocation8 + $0x38] sm:$0xff]
        %v332 = vld [vmem:[#allocation8 + $0x40] sm:$0xff]
        %v333 = vld [vmem:[#allocation8 + $0x48] sm:$0xff]
        %v334 = vld [vmem:[#allocation8 + $0x50] sm:$0xff]
        %v335 = vld [vmem:[#allocation8 + $0x58] sm:$0xff]
        %v336 = vld [vmem:[#allocation8 + $0x60] sm:$0xff]
        %v337 = vld [vmem:[#allocation8 + $0x68] sm:$0xff]
        %v338 = vld [vmem:[#allocation8 + $0x70] sm:$0xff]
        %v339 = vld [vmem:[#allocation8 + $0x78] sm:$0xff]
        %340 = vmatprep.subr.mxu0 0.0
        %341 = vmatpush1.msra.mxu0 %v324
        %342 = vmatprep.subr.mxu0 0.0
        %343 = vmatpush1.msra.mxu0 %v325
        %344 = vmatprep.subr.mxu0 0.0
        %345 = vmatpush1.msra.mxu0 %v326
        %346 = vmatprep.subr.mxu0 0.0
        %347 = vmatpush1.msra.mxu0 %v327
        %348 = vmatprep.subr.mxu0 0.0
        %349 = vmatpush1.msra.mxu0 %v328
        %350 = vmatprep.subr.mxu0 0.0
        %351 = vmatpush1.msra.mxu0 %v329
        %352 = vmatprep.subr.mxu0 0.0
        %353 = vmatpush1.msra.mxu0 %v330
        %354 = vmatprep.subr.mxu0 0.0
        %355 = vmatpush1.msra.mxu0 %v331
        %356 = vmatprep.subr.mxu0 0.0
        %357 = vmatpush1.msra.mxu0 %v332
        %358 = vmatprep.subr.mxu0 0.0
        %359 = vmatpush1.msra.mxu0 %v333
        %360 = vmatprep.subr.mxu0 0.0
        %361 = vmatpush1.msra.mxu0 %v334
        %362 = vmatprep.subr.mxu0 0.0
        %363 = vmatpush1.msra.mxu0 %v335
        %364 = vmatprep.subr.mxu0 0.0
        %365 = vmatpush1.msra.mxu0 %v336
        %366 = vmatprep.subr.mxu0 0.0
        %367 = vmatpush1.msra.mxu0 %v337
        %368 = vmatprep.subr.mxu0 0.0
        %369 = vmatpush1.msra.mxu0 %v338
        %370 = vmatprep.subr.mxu0 0.0
        %371 = vmatpush1.msra.mxu0 %v339
        %372 = vmatprep.subr.mxu0 0.0
        %373 = vmatpush1.msra.mxu0 0.0
        %374 = vmatprep.subr.mxu0 0.0
        %375 = vmatpush1.msra.mxu0 0.0
        %376 = vmatprep.subr.mxu0 0.0
        %377 = vmatpush1.msra.mxu0 0.0
        %378 = vmatprep.subr.mxu0 0.0
        %379 = vmatpush1.msra.mxu0 0.0
        %380 = vmatprep.subr.mxu0 0.0
        %381 = vmatpush1.msra.mxu0 0.0
        %382 = vmatprep.subr.mxu0 0.0
        %383 = vmatpush1.msra.mxu0 0.0
        %384 = vmatprep.subr.mxu0 0.0
        %385 = vmatpush1.msra.mxu0 0.0
        %386 = vmatprep.subr.mxu0 0.0
        %387 = vmatpush1.msra.mxu0 0.0
        %388 = vmatprep.subr.mxu0 0.0
        %389 = vmatpush1.msra.mxu0 0.0
        %390 = vmatprep.subr.mxu0 0.0
        %391 = vmatpush1.msra.mxu0 0.0
        %392 = vmatprep.subr.mxu0 0.0
        %393 = vmatpush1.msra.mxu0 0.0
        %394 = vmatprep.subr.mxu0 0.0
        %395 = vmatpush1.msra.mxu0 0.0
        %396 = vmatprep.subr.mxu0 0.0
        %397 = vmatpush1.msra.mxu0 0.0
        %398 = vmatprep.subr.mxu0 0.0
        %399 = vmatpush1.msra.mxu0 0.0
        %400 = vmatprep.subr.mxu0 0.0
        %401 = vmatpush1.msra.mxu0 0.0
        %402 = vmatprep.subr.mxu0 0.0
        %403 = vmatpush1.msra.mxu0 0.0
        %404 = vmatprep.mubr.f32.mxu0 0.0
        %405 = vmatmul.mubr.f32.gmra.mrb[0].mxu0 %v307
        %v406 = vpop.f32.mrb[0].mxu0
        %v407 = vadd.f32 0.0, %v406
        %v408 = vpop.f32.mrb[0].mxu0
        %409 = vdwg.mxu0
        %410 = vmatprep.subr.mxu0 0.0
        %411 = vmatpush1.msra.mxu0 %v308
        %412 = vmatprep.subr.mxu0 0.0
        %413 = vmatpush1.msra.mxu0 %v309
        %414 = vmatprep.subr.mxu0 0.0
        %415 = vmatpush1.msra.mxu0 %v310
        %416 = vmatprep.subr.mxu0 0.0
        %417 = vmatpush1.msra.mxu0 %v311
        %418 = vmatprep.subr.mxu0 0.0
        %419 = vmatpush1.msra.mxu0 %v312
        %420 = vmatprep.subr.mxu0 0.0
        %421 = vmatpush1.msra.mxu0 %v313
        %422 = vmatprep.subr.mxu0 0.0
        %423 = vmatpush1.msra.mxu0 %v314
        %424 = vmatprep.subr.mxu0 0.0
        %425 = vmatpush1.msra.mxu0 %v315
        %426 = vmatprep.subr.mxu0 0.0
        %427 = vmatpush1.msra.mxu0 %v316
        %428 = vmatprep.subr.mxu0 0.0
        %429 = vmatpush1.msra.mxu0 %v317
        %430 = vmatprep.subr.mxu0 0.0
        %431 = vmatpush1.msra.mxu0 %v318
        %432 = vmatprep.subr.mxu0 0.0
        %433 = vmatpush1.msra.mxu0 %v319
        %434 = vmatprep.subr.mxu0 0.0
        %435 = vmatpush1.msra.mxu0 %v320
        %436 = vmatprep.subr.mxu0 0.0
        %437 = vmatpush1.msra.mxu0 %v321
        %438 = vmatprep.subr.mxu0 0.0
        %439 = vmatpush1.msra.mxu0 %v322
        %440 = vmatprep.subr.mxu0 0.0
        %441 = vmatpush1.msra.mxu0 %v323
        %442 = vmatprep.subr.mxu0 0.0
        %443 = vmatpush1.msra.mxu0 0.0
        %444 = vmatprep.subr.mxu0 0.0
        %445 = vmatpush1.msra.mxu0 0.0
        %446 = vmatprep.subr.mxu0 0.0
        %447 = vmatpush1.msra.mxu0 0.0
        %448 = vmatprep.subr.mxu0 0.0
        %449 = vmatpush1.msra.mxu0 0.0
        %450 = vmatprep.subr.mxu0 0.0
        %451 = vmatpush1.msra.mxu0 0.0
        %452 = vmatprep.subr.mxu0 0.0
        %453 = vmatpush1.msra.mxu0 0.0
        %454 = vmatprep.subr.mxu0 0.0
        %455 = vmatpush1.msra.mxu0 0.0
        %456 = vmatprep.subr.mxu0 0.0
        %457 = vmatpush1.msra.mxu0 0.0
        %458 = vmatprep.subr.mxu0 0.0
        %459 = vmatpush1.msra.mxu0 0.0
        %460 = vmatprep.subr.mxu0 0.0
        %461 = vmatpush1.msra.mxu0 0.0
        %462 = vmatprep.subr.mxu0 0.0
        %463 = vmatpush1.msra.mxu0 0.0
        %464 = vmatprep.subr.mxu0 0.0
        %465 = vmatpush1.msra.mxu0 0.0
        %466 = vmatprep.subr.mxu0 0.0
        %467 = vmatpush1.msra.mxu0 0.0
        %468 = vmatprep.subr.mxu0 0.0
        %469 = vmatpush1.msra.mxu0 0.0
        %470 = vmatprep.subr.mxu0 0.0
        %471 = vmatpush1.msra.mxu0 0.0
        %472 = vmatprep.subr.mxu0 0.0
        %473 = vmatpush1.msra.mxu0 0.0
        %474 = vmatprep.mubr.f32.mxu0 0.0
        %475 = vmatmul.mubr.f32.gmra.mrb[0].mxu0 %v306
        %v476 = vpop.f32.mrb[0].mxu0
        %v477 = vadd.f32 %v407, %v476
        %v478 = vpop.f32.mrb[0].mxu0
        %479 = vdwg.mxu0
        %v480 = vld [vmem:[%s4] sm:$0x1]
        %v482 = vlaneseq
        %v483 = vshrl.u32 %v482, 7
        %v484 = vsub.s32 0, %v483
        %v485 = vrot.slane %v480, %v484
        %v487 = vadd.f32 %v477, %v485
        %v488 = vmax.f32 %v487, 0.0
        %489 = vst [vmem:[%s305] sm:$0xff] %v488
        %s490 = sand.u32 %s149, 1
        %s491 = scalar_lea.sflag [#allocation4], %s490
        %s492 = sand.u32 %s149, 1
        %s493 = smul.addr %s492, 8
        %s494 = scalar_lea.vmem [#allocation10], %s493
        // Predicated region
        $region57: #{tpu_custom_call.1} parent=39 // pred_check
          %p495 = pneg %p159
        $region58: #{tpu_custom_call.1} parent=39 // pred_check_branch
          %497 = sbr.rel (%p495) target = $region60
        $region59: #{tpu_custom_call.1} parent=39 // pred_region
          %s499 = ssub.s32 128, 128
          %500 = vsyncadd %s491, %s499
          %s501 = smul.addr %s26, 128
          %s502 = scalar_lea.hbm %s5, %s501
          %s504 = sshll.u32 %s494, 4
          %s505 = int_to_ptr.vmem [resolvable:$true] %s504
          %507 = dma.vmem_to_hbm [thread:$0]  %s505, 128, %s502, %s491
        $region60: #{tpu_custom_call.1} parent=39 // pred_fallthru
          _
      $region40: #{tpu_custom_call.1} parent=5 // pred_fallthru
        _
      %p508 = scmp.le.s32.totalorder 2, %s21
      // Predicated region
      $region61: #{tpu_custom_call.1} parent=5 // pred_check
        %p509 = pneg %p508
      $region62: #{tpu_custom_call.1} parent=5 // pred_check_branch
        %511 = sbr.rel (%p509) target = $region64
      $region63: #{tpu_custom_call.1} parent=5 // pred_region
        %s512 = ssub.s32 %s21, 2
        // Predicated region
        $region65: #{tpu_custom_call.1} parent=63 // pred_check
          %p513 = pneg %p165
        $region66: #{tpu_custom_call.1} parent=63 // pred_check_branch
          %515 = sbr.rel (%p513) target = $region68
        $region67: #{tpu_custom_call.1} parent=63 // pred_region
          %s516 = sand.u32 %s150, 1
          %s517 = scalar_lea.sflag [#allocation4], %s516
          %s518 = sand.u32 %s150, 1
          %s519 = smul.addr %s518, 8
          %s520 = scalar_lea.vmem [#allocation10], %s519
          %521 = dma.done %s517, 128
        $region68: #{tpu_custom_call.1} parent=63 // pred_fallthru
          _
      $region64: #{tpu_custom_call.1} parent=5 // pred_fallthru
        _
    $region6: #{tpu_custom_call.1} parent=1 // loop_footer
      %s25 = sadd.s32 1, %s21
    $region7: #{tpu_custom_call.1} parent=1 // loop_footer_branch
      %20 = sbr.rel target = $region3
    $region8: #{tpu_custom_call.1} parent=1 // loop_exit
      _
    %522 = vsyncpa [#allocation3], 1
    %s523 = scalar_lea.sflag [#allocation3], 1
    %524 = vsyncpa %s523, 1
    %525 = vsyncpa [#allocation6], 1
    %s526 = scalar_lea.sflag [#allocation6], 1
    %527 = vsyncpa %s526, 1
    %528 = vsyncpa [#allocation9], 1
    %529 = vsyncpa [#allocation4], 1
    %s530 = scalar_lea.sflag [#allocation4], 1
    %531 = vsyncpa %s530, 1

// kernel: tpu_custom_call.1
$region0: #{tpu_custom_call.1}
  #allocation0 [shape = 'u32[]', space=smem, size = 0x4, offset = 0x4, fixed_abs, tag = 'smem constant byte address 0x4 - core index']
  #allocation1 [shape = 'u32[144,128]{1,0:T(1,128)}', space=vmem, size = 0x12000, scoped, tag = 'internal scratch']
  %s0 = inlined_call_operand.hbm [shape: f32[16,128], index: 0, kind: input, shape index: {}]
  %s1 = inlined_call_operand.hbm [shape: f32[16,128], index: 1, kind: input, shape index: {}]
  %s2 = inlined_call_operand.hbm [shape: f32[128,128], index: 2, kind: input, shape index: {}]
  %s3 = inlined_call_operand.hbm [shape: f32[128,128], index: 3, kind: input, shape index: {}]
  %s4 = inlined_call_operand.vmem [shape: f32[1,128], index: 4, kind: input, shape index: {}]
  %s5 = inlined_call_operand.hbm [shape: f32[16,128], index: 5, kind: output, shape index: {}]
  %s6 = sld [smem:[#allocation0]]
  $region69: #{tpu_custom_call.1} parent=0
    _
  %s8 = ssub.s32 1, %s6
  %s9 = scalar_select 0, %s8, %s6
  $region1: #{tpu_custom_call.1} parent=0
    #allocation2 [shape = 'u8[8192]{0}', space=vmem, size = 0x2000, scoped, tag = 'input window, operand 0']
    #allocation3 [shape = 's32[2]{0}', space=sflag, size = 0x8, scoped, tag = 'scoped memory for tpu_custom_call.1']
    #allocation4 [shape = 's32[2]{0}', space=sflag, size = 0x8, scoped, tag = 'scoped memory for tpu_custom_call.1']
    #allocation5 [shape = 'u8[8192]{0}', space=vmem, size = 0x2000, scoped, tag = 'input window, operand 1']
    #allocation6 [shape = 's32[2]{0}', space=sflag, size = 0x8, scoped, tag = 'scoped memory for tpu_custom_call.1']
    #allocation7 [shape = 'u8[65536]{0}', space=vmem, size = 0x10000, scoped, tag = 'input window, operand 2, single buffered']
    #allocation8 [shape = 'u8[65536]{0}', space=vmem, size = 0x10000, scoped, tag = 'input window, operand 3, single buffered']
    #allocation9 [shape = 's32[1]{0}', space=sflag, size = 0x4, scoped, tag = 'scoped memory for tpu_custom_call.1']
    #allocation10 [shape = 'u8[8192]{0}', space=vmem, size = 0x2000, scoped, tag = 'output window, operand 0']
    %10 = vsyncpa [#allocation3], 0
    %s11 = scalar_lea.sflag [#allocation3], 1
    %12 = vsyncpa %s11, 0
    %13 = vsyncpa [#allocation6], 0
    %s14 = scalar_lea.sflag [#allocation6], 1
    %15 = vsyncpa %s14, 0
    %16 = vsyncpa [#allocation9], 0
    %17 = vsyncpa [#allocation4], 0
    %s18 = scalar_lea.sflag [#allocation4], 1
    %19 = vsyncpa %s18, 0
    loop: start=0, step=1, limit=4
    $region2: #{tpu_custom_call.1} parent=1 // loop_pre_header
      _
    $region3: #{tpu_custom_call.1} parent=1 // loop_header
      %s21 = sphi 0, %s25
      %p22 = scmp.ge.s32.totalorder %s21, 4
      %s31 = sphi 0, %s33
      %s34 = sphi 0, %s31
      %s35 = sphi 0, %s34
      %s51 = sphi 0, %s35
      %s57 = sphi 0, %s59
      %s60 = sphi 0, %s57
      %s61 = sphi 0, %s60
      %s77 = sphi 0, %s61
      %s81 = sphi 0, %s81
      %s83 = sphi 0, %s81
      %s84 = sphi 0, %s83
      %s98 = sphi 0, %s84
      %s102 = sphi 0, %s102
      %s104 = sphi 0, %s102
      %s105 = sphi 0, %s104
      %s119 = sphi 0, %s105
      %s123 = sphi 0, %s123
      %s125 = sphi 0, %s123
      %s126 = sphi 0, %s125
      %s140 = sphi 0, %s126
      %s146 = sphi 0, %s148
      %s149 = sphi 0, %s146
      %s150 = sphi 0, %s149
      %s166 = sphi 0, %s150
    $region4: #{tpu_custom_call.1} parent=1 // loop_header_branch
      %24 = sbr.rel (%p22) target = $region8
    $region5: #{tpu_custom_call.1} parent=1 // loop_body
      %s26 = ssub.s32 %s21, 1
      %s27 = ssub.s32 %s21, 2
      %s28 = sadd.s32 %s21, 1
      %s29 = ssub.s32 %s21, %s28
      %p30 = scmp.eq.s32.totalorder %s29, 0
      %s32 = sadd.s32 %s31, 1
      %s33 = scalar_select %p30, %s31, %s32
      %p36 = pneg %p30
      %p37 = scmp.eq.s32.totalorder %s21, 1
      %p38 = por %p36, %p37
      %p39 = scmp.ne.s32.totalorder %s31, %s34
      %p40 = scmp.eq.s32.totalorder %s21, 0
      %p41 = por %p39, %p40
      %p42 = scmp.ne.s32.totalorder %s31, %s34
      %p43 = scmp.eq.s32.totalorder %s26, 1
      %p44 = por %p42, %p43
      %p45 = scmp.ne.s32.totalorder %s34, %s35
      %p46 = scmp.eq.s32.totalorder %s26, 0
      %p47 = por %p45, %p46
      %p48 = scmp.ne.s32.totalorder %s34, %s35
      %p49 = scmp.eq.s32.totalorder %s27, 1
      %p50 = por %p48, %p49
      %p52 = scmp.ne.s32.totalorder %s35, %s51
      %p53 = scmp.eq.s32.totalorder %s27, 0
      %p54 = por %p52, %p53
      %s55 = ssub.s32 %s21, %s28
      %p56 = scmp.eq.s32.totalorder %s55, 0
      %s58 = sadd.s32 %s57, 1
      %s59 = scalar_select %p56, %s57, %s58
      %p62 = pneg %p56
      %p63 = scmp.eq.s32.totalorder %s21, 1
      %p64 = por %p62, %p63
      %p65 = scmp.ne.s32.totalorder %s57, %s60
      %p66 = scmp.eq.s32.totalorder %s21, 0
      %p67 = por %p65, %p66
      %p68 = scmp.ne.s32.totalorder %s57, %s60
      %p69 = scmp.eq.s32.totalorder %s26, 1
      %p70 = por %p68, %p69
      %p71 = scmp.ne.s32.totalorder %s60, %s61
      %p72 = scmp.eq.s32.totalorder %s26, 0
      %p73 = por %p71, %p72
      %p74 = scmp.ne.s32.totalorder %s60, %s61
      %p75 = scmp.eq.s32.totalorder %s27, 1
      %p76 = por %p74, %p75
      %p78 = scmp.ne.s32.totalorder %s61, %s77
      %p79 = scmp.eq.s32.totalorder %s27, 0
      %p80 = por %p78, %p79
      %s82 = sadd.s32 %s81, 1
      %p85 = scmp.eq.s32.totalorder %s21, 1
      %p86 = scmp.ne.s32.totalorder %s81, %s83
      %p87 = scmp.eq.s32.totalorder %s21, 0
      %p88 = por %p86, %p87
      %p89 = scmp.ne.s32.totalorder %s81, %s83
      %p90 = scmp.eq.s32.totalorder %s26, 1
      %p91 = por %p89, %p90
      %p92 = scmp.ne.s32.totalorder %s83, %s84
      %p93 = scmp.eq.s32.totalorder %s26, 0
      %p94 = por %p92, %p93
      %p95 = scmp.ne.s32.totalorder %s83, %s84
      %p96 = scmp.eq.s32.totalorder %s27, 1
      %p97 = por %p95, %p96
      %p99 = scmp.ne.s32.totalorder %s84, %s98
      %p100 = scmp.eq.s32.totalorder %s27, 0
      %p101 = por %p99, %p100
      %s103 = sadd.s32 %s102, 1
      %p106 = scmp.eq.s32.totalorder %s21, 1
      %p107 = scmp.ne.s32.totalorder %s102, %s104
      %p108 = scmp.eq.s32.totalorder %s21, 0
      %p109 = por %p107, %p108
      %p110 = scmp.ne.s32.totalorder %s102, %s104
      %p111 = scmp.eq.s32.totalorder %s26, 1
      %p112 = por %p110, %p111
      %p113 = scmp.ne.s32.totalorder %s104, %s105
      %p114 = scmp.eq.s32.totalorder %s26, 0
      %p115 = por %p113, %p114
      %p116 = scmp.ne.s32.totalorder %s104, %s105
      %p117 = scmp.eq.s32.totalorder %s27, 1
      %p118 = por %p116, %p117
      %p120 = scmp.ne.s32.totalorder %s105, %s119
      %p121 = scmp.eq.s32.totalorder %s27, 0
      %p122 = por %p120, %p121
      %s124 = sadd.s32 %s123, 1
      %p127 = scmp.eq.s32.totalorder %s21, 1
      %p128 = scmp.ne.s32.totalorder %s123, %s125
      %p129 = scmp.eq.s32.totalorder %s21, 0
      %p130 = por %p128, %p129
      %p131 = scmp.ne.s32.totalorder %s123, %s125
      %p132 = scmp.eq.s32.totalorder %s26, 1
      %p133 = por %p131, %p132
      %p134 = scmp.ne.s32.totalorder %s125, %s126
      %p135 = scmp.eq.s32.totalorder %s26, 0
      %p136 = por %p134, %p135
      %p137 = scmp.ne.s32.totalorder %s125, %s126
      %p138 = scmp.eq.s32.totalorder %s27, 1
      %p139 = por %p137, %p138
      %p141 = scmp.ne.s32.totalorder %s126, %s140
      %p142 = scmp.eq.s32.totalorder %s27, 0
      %p143 = por %p141, %p142
      %s144 = ssub.s32 %s21, %s28
      %p145 = scmp.eq.s32.totalorder %s144, 0
      %s147 = sadd.s32 %s146, 1
      %s148 = scalar_select %p145, %s146, %s147
      %p151 = pneg %p145
      %p152 = scmp.eq.s32.totalorder %s21, 1
      %p153 = por %p151, %p152
      %p154 = scmp.ne.s32.totalorder %s146, %s149
      %p155 = scmp.eq.s32.totalorder %s21, 0
      %p156 = por %p154, %p155
      %p157 = scmp.ne.s32.totalorder %s146, %s149
      %p158 = scmp.eq.s32.totalorder %s26, 1
      %p159 = por %p157, %p158
      %p160 = scmp.ne.s32.totalorder %s149, %s150
      %p161 = scmp.eq.s32.totalorder %s26, 0
      %p162 = por %p160, %p161
      %p163 = scmp.ne.s32.totalorder %s149, %s150
      %p164 = scmp.eq.s32.totalorder %s27, 1
      %p165 = por %p163, %p164
      %p167 = scmp.ne.s32.totalorder %s150, %s166
      %p168 = scmp.eq.s32.totalorder %s27, 0
      %p169 = por %p167, %p168
      %p170 = scmp.le.s32.totalorder 1, %s21
      %p171 = scmp.lt.s32.totalorder %s21, 3
      %p172 = pnand %p170, %p171
      %p173 = pneg %p172
      // Predicated region
      $region9: #{tpu_custom_call.1} parent=5 // pred_check
        _
      $region10: #{tpu_custom_call.1} parent=5 // pred_check_branch
        %175 = sbr.rel (%p172) target = $region12
      $region11: #{tpu_custom_call.1} parent=5 // pred_region
        %s176 = ssub.s32 %s21, 1
        // Predicated region
        $region13: #{tpu_custom_call.1} parent=11 // pred_check
          %p177 = pneg %p94
        $region14: #{tpu_custom_call.1} parent=11 // pred_check_branch
          %179 = sbr.rel (%p177) target = $region16
        $region15: #{tpu_custom_call.1} parent=11 // pred_region
          %s181 = ssub.s32 2048, 2048
          %182 = vsyncadd [#allocation6], %s181
          %s183 = sshll.u32 [#allocation7], 4
          %s184 = int_to_ptr.vmem [resolvable:$true] %s183
          %189 = dma.hbm_to_vmem [thread:$0]  %s2, 2048, %s184, [#allocation6], 128, 128, 8
        $region16: #{tpu_custom_call.1} parent=11 // pred_fallthru
          _
        // Predicated region
        $region17: #{tpu_custom_call.1} parent=11 // pred_check
          %p190 = pneg %p115
        $region18: #{tpu_custom_call.1} parent=11 // pred_check_branch
          %192 = sbr.rel (%p190) target = $region20
        $region19: #{tpu_custom_call.1} parent=11 // pred_region
          %s194 = ssub.s32 2048, 2048
          %195 = vsyncadd [#allocation9], %s194
          %s196 = sshll.u32 [#allocation8], 4
          %s197 = int_to_ptr.vmem [resolvable:$true] %s196
          %202 = dma.hbm_to_vmem [thread:$0]  %s3, 2048, %s197, [#allocation9], 128, 128, 8
        $region20: #{tpu_custom_call.1} parent=11 // pred_fallthru
          _
        // Predicated region
        $region21: #{tpu_custom_call.1} parent=11 // pred_check
          %p203 = pneg %p136
        $region22: #{tpu_custom_call.1} parent=11 // pred_check_branch
          %205 = sbr.rel (%p203) target = $region24
        $region23: #{tpu_custom_call.1} parent=11 // pred_region
          _
        $region24: #{tpu_custom_call.1} parent=11 // pred_fallthru
          _
      $region12: #{tpu_custom_call.1} parent=5 // pred_fallthru
        _
      %p206 = scmp.lt.s32.totalorder %s21, 2
      // Predicated region
      $region25: #{tpu_custom_call.1} parent=5 // pred_check
        %p207 = pneg %p206
      $region26: #{tpu_custom_call.1} parent=5 // pred_check_branch
        %209 = sbr.rel (%p207) target = $region28
      $region27: #{tpu_custom_call.1} parent=5 // pred_region
        // Predicated region
        $region29: #{tpu_custom_call.1} parent=27 // pred_check
          %p210 = pneg %p41
        $region30: #{tpu_custom_call.1} parent=27 // pred_check_branch
          %212 = sbr.rel (%p210) target = $region32
        $region31: #{tpu_custom_call.1} parent=27 // pred_region
          %s213 = sand.u32 %s31, 1
          %s214 = scalar_lea.sflag [#allocation3], %s213
          %s215 = sand.u32 %s31, 1
          %s216 = smul.addr %s215, 8
          %s217 = scalar_lea.vmem [#allocation2], %s216
          %s219 = ssub.s32 128, 128
          %220 = vsyncadd %s214, %s219
          %s221 = smul.addr %s21, 128
          %s222 = scalar_lea.hbm %s0, %s221
          %s224 = sshll.u32 %s217, 4
          %s225 = int_to_ptr.vmem [resolvable:$true] %s224
          %227 = dma.hbm_to_vmem [thread:$0]  %s222, 128, %s225, %s214
        $region32: #{tpu_custom_call.1} parent=27 // pred_fallthru
          _
        // Predicated region
        $region33: #{tpu_custom_call.1} parent=27 // pred_check
          %p228 = pneg %p67
        $region34: #{tpu_custom_call.1} parent=27 // pred_check_branch
          %230 = sbr.rel (%p228) target = $region36
        $region35: #{tpu_custom_call.1} parent=27 // pred_region
          %s231 = sand.u32 %s21, 1
          %s232 = scalar_lea.sflag [#allocation6], %s231
          %s233 = sand.u32 %s57, 1
          %s234 = smul.addr %s233, 8
          %s235 = scalar_lea.vmem [#allocation5], %s234
          %s237 = ssub.s32 128, 128
          %238 = vsyncadd %s232, %s237
          %s239 = smul.addr %s21, 128
          %s240 = scalar_lea.hbm %s1, %s239
          %s242 = sshll.u32 %s235, 4
          %s243 = int_to_ptr.vmem [resolvable:$true] %s242
          %245 = dma.hbm_to_vmem [thread:$0]  %s240, 128, %s243, %s232
        $region36: #{tpu_custom_call.1} parent=27 // pred_fallthru
          _
      $region28: #{tpu_custom_call.1} parent=5 // pred_fallthru
        _
      %p246 = scmp.le.s32.totalorder 1, %s21
      %p247 = scmp.lt.s32.totalorder %s21, 3
      %p248 = pnand %p246, %p247
      %p249 = pneg %p248
      // Predicated region
      $region37: #{tpu_custom_call.1} parent=5 // pred_check
        _
      $region38: #{tpu_custom_call.1} parent=5 // pred_check_branch
        %251 = sbr.rel (%p248) target = $region40
      $region39: #{tpu_custom_call.1} parent=5 // pred_region
        %s252 = ssub.s32 %s21, 1
        %s253 = sand.u32 %s34, 1
        %s254 = scalar_lea.sflag [#allocation3], %s253
        %s255 = sand.u32 %s34, 1
        %s256 = smul.addr %s255, 8
        %s257 = scalar_lea.vmem [#allocation2], %s256
        // Predicated region
        $region41: #{tpu_custom_call.1} parent=39 // pred_check
          %p258 = pneg %p47
        $region42: #{tpu_custom_call.1} parent=39 // pred_check_branch
          %260 = sbr.rel (%p258) target = $region44
        $region43: #{tpu_custom_call.1} parent=39 // pred_region
          %261 = dma.done %s254, 128
        $region44: #{tpu_custom_call.1} parent=39 // pred_fallthru
          _
        %s262 = sand.u32 %s26, 1
        %s263 = scalar_lea.sflag [#allocation6], %s262
        %s264 = sand.u32 %s60, 1
        %s265 = smul.addr %s264, 8
        %s266 = scalar_lea.vmem [#allocation5], %s265
        // Predicated region
        $region45: #{tpu_custom_call.1} parent=39 // pred_check
          %p267 = pneg %p73
        $region46: #{tpu_custom_call.1} parent=39 // pred_check_branch
          %269 = sbr.rel (%p267) target = $region48
        $region47: #{tpu_custom_call.1} parent=39 // pred_region
          %270 = dma.done %s263, 128
        $region48: #{tpu_custom_call.1} parent=39 // pred_fallthru
          _
        // Predicated region
        $region49: #{tpu_custom_call.1} parent=39 // pred_check
          %p271 = pneg %p94
        $region50: #{tpu_custom_call.1} parent=39 // pred_check_branch
          %273 = sbr.rel (%p271) target = $region52
        $region51: #{tpu_custom_call.1} parent=39 // pred_region
          %274 = dma.done [#allocation6], 2048
        $region52: #{tpu_custom_call.1} parent=39 // pred_fallthru
          _
        // Predicated region
        $region53: #{tpu_custom_call.1} parent=39 // pred_check
          %p275 = pneg %p115
        $region54: #{tpu_custom_call.1} parent=39 // pred_check_branch
          %277 = sbr.rel (%p275) target = $region56
        $region55: #{tpu_custom_call.1} parent=39 // pred_region
          %278 = dma.done [#allocation9], 2048
        $region56: #{tpu_custom_call.1} parent=39 // pred_fallthru
          _
        %s279 = sand.u32 %s34, 1
        %s280 = scalar_lea.sflag [#allocation3], %s279
        %s281 = sand.u32 %s34, 1
        %s282 = smul.addr %s281, 8
        %s283 = scalar_lea.vmem [#allocation2], %s282
        %p284 = pneg %p47
        %p285 = pneg %p44
        %s286 = sand.u32 %s26, 1
        %s287 = scalar_lea.sflag [#allocation6], %s286
        %s288 = sand.u32 %s60, 1
        %s289 = smul.addr %s288, 8
        %s290 = scalar_lea.vmem [#allocation5], %s289
        %p291 = pneg %p73
        %p292 = pneg %p70
        %p293 = pneg %p94
        %p294 = pneg %p91
        %p295 = pneg %p115
        %p296 = pneg %p112
        %p297 = pneg %p136
        %p298 = pneg %p133
        %p299 = pneg %p162
        %p300 = pneg %p159
        %s301 = sand.u32 %s149, 1
        %s302 = scalar_lea.sflag [#allocation4], %s301
        %s303 = sand.u32 %s149, 1
        %s304 = smul.addr %s303, 8
        %s305 = scalar_lea.vmem [#allocation10], %s304
        %v306 = vld [vmem:[%s257] sm:$0xff]
        %v307 = vld [vmem:[%s266] sm:$0xff]
        %v308 = vld [vmem:[#allocation7] sm:$0xff]
        %v309 = vld [vmem:[#allocation7 + $0x8] sm:$0xff]
        %v310 = vld [vmem:[#allocation7 + $0x10] sm:$0xff]
        %v311 = vld [vmem:[#allocation7 + $0x18] sm:$0xff]
        %v312 = vld [vmem:[#allocation7 + $0x20] sm:$0xff]
        %v313 = vld [vmem:[#allocation7 + $0x28] sm:$0xff]
        %v314 = vld [vmem:[#allocation7 + $0x30] sm:$0xff]
        %v315 = vld [vmem:[#allocation7 + $0x38] sm:$0xff]
        %v316 = vld [vmem:[#allocation7 + $0x40] sm:$0xff]
        %v317 = vld [vmem:[#allocation7 + $0x48] sm:$0xff]
        %v318 = vld [vmem:[#allocation7 + $0x50] sm:$0xff]
        %v319 = vld [vmem:[#allocation7 + $0x58] sm:$0xff]
        %v320 = vld [vmem:[#allocation7 + $0x60] sm:$0xff]
        %v321 = vld [vmem:[#allocation7 + $0x68] sm:$0xff]
        %v322 = vld [vmem:[#allocation7 + $0x70] sm:$0xff]
        %v323 = vld [vmem:[#allocation7 + $0x78] sm:$0xff]
        %v324 = vld [vmem:[#allocation8] sm:$0xff]
        %v325 = vld [vmem:[#allocation8 + $0x8] sm:$0xff]
        %v326 = vld [vmem:[#allocation8 + $0x10] sm:$0xff]
        %v327 = vld [vmem:[#allocation8 + $0x18] sm:$0xff]
        %v328 = vld [vmem:[#allocation8 + $0x20] sm:$0xff]
        %v329 = vld [vmem:[#allocation8 + $0x28] sm:$0xff]
        %v330 = vld [vmem:[#allocation8 + $0x30] sm:$0xff]
        %v331 = vld [vmem:[#allocation8 + $0x38] sm:$0xff]
        %v332 = vld [vmem:[#allocation8 + $0x40] sm:$0xff]
        %v333 = vld [vmem:[#allocation8 + $0x48] sm:$0xff]
        %v334 = vld [vmem:[#allocation8 + $0x50] sm:$0xff]
        %v335 = vld [vmem:[#allocation8 + $0x58] sm:$0xff]
        %v336 = vld [vmem:[#allocation8 + $0x60] sm:$0xff]
        %v337 = vld [vmem:[#allocation8 + $0x68] sm:$0xff]
        %v338 = vld [vmem:[#allocation8 + $0x70] sm:$0xff]
        %v339 = vld [vmem:[#allocation8 + $0x78] sm:$0xff]
        %340 = vmatprep.subr.mxu0 0.0
        %341 = vmatpush1.msra.mxu0 %v324
        %342 = vmatprep.subr.mxu0 0.0
        %343 = vmatpush1.msra.mxu0 %v325
        %344 = vmatprep.subr.mxu0 0.0
        %345 = vmatpush1.msra.mxu0 %v326
        %346 = vmatprep.subr.mxu0 0.0
        %347 = vmatpush1.msra.mxu0 %v327
        %348 = vmatprep.subr.mxu0 0.0
        %349 = vmatpush1.msra.mxu0 %v328
        %350 = vmatprep.subr.mxu0 0.0
        %351 = vmatpush1.msra.mxu0 %v329
        %352 = vmatprep.subr.mxu0 0.0
        %353 = vmatpush1.msra.mxu0 %v330
        %354 = vmatprep.subr.mxu0 0.0
        %355 = vmatpush1.msra.mxu0 %v331
        %356 = vmatprep.subr.mxu0 0.0
        %357 = vmatpush1.msra.mxu0 %v332
        %358 = vmatprep.subr.mxu0 0.0
        %359 = vmatpush1.msra.mxu0 %v333
        %360 = vmatprep.subr.mxu0 0.0
        %361 = vmatpush1.msra.mxu0 %v334
        %362 = vmatprep.subr.mxu0 0.0
        %363 = vmatpush1.msra.mxu0 %v335
        %364 = vmatprep.subr.mxu0 0.0
        %365 = vmatpush1.msra.mxu0 %v336
        %366 = vmatprep.subr.mxu0 0.0
        %367 = vmatpush1.msra.mxu0 %v337
        %368 = vmatprep.subr.mxu0 0.0
        %369 = vmatpush1.msra.mxu0 %v338
        %370 = vmatprep.subr.mxu0 0.0
        %371 = vmatpush1.msra.mxu0 %v339
        %372 = vmatprep.subr.mxu0 0.0
        %373 = vmatpush1.msra.mxu0 0.0
        %374 = vmatprep.subr.mxu0 0.0
        %375 = vmatpush1.msra.mxu0 0.0
        %376 = vmatprep.subr.mxu0 0.0
        %377 = vmatpush1.msra.mxu0 0.0
        %378 = vmatprep.subr.mxu0 0.0
        %379 = vmatpush1.msra.mxu0 0.0
        %380 = vmatprep.subr.mxu0 0.0
        %381 = vmatpush1.msra.mxu0 0.0
        %382 = vmatprep.subr.mxu0 0.0
        %383 = vmatpush1.msra.mxu0 0.0
        %384 = vmatprep.subr.mxu0 0.0
        %385 = vmatpush1.msra.mxu0 0.0
        %386 = vmatprep.subr.mxu0 0.0
        %387 = vmatpush1.msra.mxu0 0.0
        %388 = vmatprep.subr.mxu0 0.0
        %389 = vmatpush1.msra.mxu0 0.0
        %390 = vmatprep.subr.mxu0 0.0
        %391 = vmatpush1.msra.mxu0 0.0
        %392 = vmatprep.subr.mxu0 0.0
        %393 = vmatpush1.msra.mxu0 0.0
        %394 = vmatprep.subr.mxu0 0.0
        %395 = vmatpush1.msra.mxu0 0.0
        %396 = vmatprep.subr.mxu0 0.0
        %397 = vmatpush1.msra.mxu0 0.0
        %398 = vmatprep.subr.mxu0 0.0
        %399 = vmatpush1.msra.mxu0 0.0
        %400 = vmatprep.subr.mxu0 0.0
        %401 = vmatpush1.msra.mxu0 0.0
        %402 = vmatprep.subr.mxu0 0.0
        %403 = vmatpush1.msra.mxu0 0.0
        %404 = vmatprep.mubr.f32.mxu0 0.0
        %405 = vmatmul.mubr.f32.gmra.mrb[0].mxu0 %v307
        %v406 = vpop.f32.mrb[0].mxu0
        %v407 = vadd.f32 0.0, %v406
        %v408 = vpop.f32.mrb[0].mxu0
        %409 = vdwg.mxu0
        %410 = vmatprep.subr.mxu0 0.0
        %411 = vmatpush1.msra.mxu0 %v308
        %412 = vmatprep.subr.mxu0 0.0
        %413 = vmatpush1.msra.mxu0 %v309
        %414 = vmatprep.subr.mxu0 0.0
        %415 = vmatpush1.msra.mxu0 %v310
        %416 = vmatprep.subr.mxu0 0.0
        %417 = vmatpush1.msra.mxu0 %v311
        %418 = vmatprep.subr.mxu0 0.0
        %419 = vmatpush1.msra.mxu0 %v312
        %420 = vmatprep.subr.mxu0 0.0
        %421 = vmatpush1.msra.mxu0 %v313
        %422 = vmatprep.subr.mxu0 0.0
        %423 = vmatpush1.msra.mxu0 %v314
        %424 = vmatprep.subr.mxu0 0.0
        %425 = vmatpush1.msra.mxu0 %v315
        %426 = vmatprep.subr.mxu0 0.0
        %427 = vmatpush1.msra.mxu0 %v316
        %428 = vmatprep.subr.mxu0 0.0
        %429 = vmatpush1.msra.mxu0 %v317
        %430 = vmatprep.subr.mxu0 0.0
        %431 = vmatpush1.msra.mxu0 %v318
        %432 = vmatprep.subr.mxu0 0.0
        %433 = vmatpush1.msra.mxu0 %v319
        %434 = vmatprep.subr.mxu0 0.0
        %435 = vmatpush1.msra.mxu0 %v320
        %436 = vmatprep.subr.mxu0 0.0
        %437 = vmatpush1.msra.mxu0 %v321
        %438 = vmatprep.subr.mxu0 0.0
        %439 = vmatpush1.msra.mxu0 %v322
        %440 = vmatprep.subr.mxu0 0.0
        %441 = vmatpush1.msra.mxu0 %v323
        %442 = vmatprep.subr.mxu0 0.0
        %443 = vmatpush1.msra.mxu0 0.0
        %444 = vmatprep.subr.mxu0 0.0
        %445 = vmatpush1.msra.mxu0 0.0
        %446 = vmatprep.subr.mxu0 0.0
        %447 = vmatpush1.msra.mxu0 0.0
        %448 = vmatprep.subr.mxu0 0.0
        %449 = vmatpush1.msra.mxu0 0.0
        %450 = vmatprep.subr.mxu0 0.0
        %451 = vmatpush1.msra.mxu0 0.0
        %452 = vmatprep.subr.mxu0 0.0
        %453 = vmatpush1.msra.mxu0 0.0
        %454 = vmatprep.subr.mxu0 0.0
        %455 = vmatpush1.msra.mxu0 0.0
        %456 = vmatprep.subr.mxu0 0.0
        %457 = vmatpush1.msra.mxu0 0.0
        %458 = vmatprep.subr.mxu0 0.0
        %459 = vmatpush1.msra.mxu0 0.0
        %460 = vmatprep.subr.mxu0 0.0
        %461 = vmatpush1.msra.mxu0 0.0
        %462 = vmatprep.subr.mxu0 0.0
        %463 = vmatpush1.msra.mxu0 0.0
        %464 = vmatprep.subr.mxu0 0.0
        %465 = vmatpush1.msra.mxu0 0.0
        %466 = vmatprep.subr.mxu0 0.0
        %467 = vmatpush1.msra.mxu0 0.0
        %468 = vmatprep.subr.mxu0 0.0
        %469 = vmatpush1.msra.mxu0 0.0
        %470 = vmatprep.subr.mxu0 0.0
        %471 = vmatpush1.msra.mxu0 0.0
        %472 = vmatprep.subr.mxu0 0.0
        %473 = vmatpush1.msra.mxu0 0.0
        %474 = vmatprep.mubr.f32.mxu0 0.0
        %475 = vmatmul.mubr.f32.gmra.mrb[0].mxu0 %v306
        %v476 = vpop.f32.mrb[0].mxu0
        %v477 = vadd.f32 %v407, %v476
        %v478 = vpop.f32.mrb[0].mxu0
        %479 = vdwg.mxu0
        %v480 = vld [vmem:[%s4] sm:$0x1]
        %v482 = vlaneseq
        %v483 = vshrl.u32 %v482, 7
        %v484 = vsub.s32 0, %v483
        %v485 = vrot.slane %v480, %v484
        %v487 = vadd.f32 %v477, %v485
        %v488 = vmax.f32 %v487, 0.0
        %489 = vst [vmem:[%s305] sm:$0xff] %v488
        %s490 = sand.u32 %s149, 1
        %s491 = scalar_lea.sflag [#allocation4], %s490
        %s492 = sand.u32 %s149, 1
        %s493 = smul.addr %s492, 8
        %s494 = scalar_lea.vmem [#allocation10], %s493
        // Predicated region
        $region57: #{tpu_custom_call.1} parent=39 // pred_check
          %p495 = pneg %p159
        $region58: #{tpu_custom_call.1} parent=39 // pred_check_branch
          %497 = sbr.rel (%p495) target = $region60
        $region59: #{tpu_custom_call.1} parent=39 // pred_region
          %s499 = ssub.s32 128, 128
          %500 = vsyncadd %s491, %s499
          %s501 = smul.addr %s26, 128
          %s502 = scalar_lea.hbm %s5, %s501
          %s504 = sshll.u32 %s494, 4
          %s505 = int_to_ptr.vmem [resolvable:$true] %s504
          %507 = dma.vmem_to_hbm [thread:$0]  %s505, 128, %s502, %s491
        $region60: #{tpu_custom_call.1} parent=39 // pred_fallthru
          _
      $region40: #{tpu_custom_call.1} parent=5 // pred_fallthru
        _
      %p508 = scmp.le.s32.totalorder 2, %s21
      // Predicated region
      $region61: #{tpu_custom_call.1} parent=5 // pred_check
        %p509 = pneg %p508
      $region62: #{tpu_custom_call.1} parent=5 // pred_check_branch
        %511 = sbr.rel (%p509) target = $region64
      $region63: #{tpu_custom_call.1} parent=5 // pred_region
        %s512 = ssub.s32 %s21, 2
        // Predicated region
        $region65: #{tpu_custom_call.1} parent=63 // pred_check
          %p513 = pneg %p165
        $region66: #{tpu_custom_call.1} parent=63 // pred_check_branch
          %515 = sbr.rel (%p513) target = $region68
        $region67: #{tpu_custom_call.1} parent=63 // pred_region
          %s516 = sand.u32 %s150, 1
          %s517 = scalar_lea.sflag [#allocation4], %s516
          %s518 = sand.u32 %s150, 1
          %s519 = smul.addr %s518, 8
          %s520 = scalar_lea.vmem [#allocation10], %s519
          %521 = dma.done %s517, 128
        $region68: #{tpu_custom_call.1} parent=63 // pred_fallthru
          _
      $region64: #{tpu_custom_call.1} parent=5 // pred_fallthru
        _
    $region6: #{tpu_custom_call.1} parent=1 // loop_footer
      %s25 = sadd.s32 1, %s21
    $region7: #{tpu_custom_call.1} parent=1 // loop_footer_branch
      %20 = sbr.rel target = $region3
    $region8: #{tpu_custom_call.1} parent=1 // loop_exit
      _
    %522 = vsyncpa [#allocation3], 1
    %s523 = scalar_lea.sflag [#allocation3], 1
    %524 = vsyncpa %s523, 1
    %525 = vsyncpa [#allocation6], 1
    %s526 = scalar_lea.sflag [#allocation6], 1
    %527 = vsyncpa %s526, 1
    %528 = vsyncpa [#allocation9], 1
    %529 = vsyncpa [#allocation4], 1
    %s530 = scalar_lea.sflag [#allocation4], 1
    %531 = vsyncpa %s530, 1

</llo_original>
